<compile_context>
chip_gen: v7x
topology: tpu7x:2x2x1
jax: 0.10.0
libtpu: 0.0.40
codegen_flags: <defaults>
</compile_context>

<pallas_src>
import jax
import jax.numpy as jnp
from jax.experimental import pallas as pl
from jax.experimental.pallas import tpu as pltpu

LANE = 128
SUBLANE = 8


def _round_up(a, b):
    return (a + b - 1) // b * b


def _head_kernel(x_ref, w1_ref, b1_ref, w2_ref, b2_ref, o_ref):
    # x_ref:  [tm, D]        node-feature tile
    # w1_ref: [D, THp]       fused (task-stacked) first-layer weights, lane-padded
    # b1_ref: [1, THp]       fused first-layer bias (zeros in the padding)
    # w2_ref: [THp, Tp]      block-diagonal second-layer weights, lane-padded
    # b2_ref: [1, Tp]        second-layer bias (zeros in the padding)
    # o_ref:  [tm, Tp]       lane-dense output tile (real tasks in columns [:T])
    x = x_ref[...]
    h = jnp.dot(x, w1_ref[...], preferred_element_type=jnp.float32) + b1_ref[...]
    h = jnp.maximum(h, 0.0)  # ReLU (f32 on the VPU)
    y = jnp.dot(h, w2_ref[...], preferred_element_type=jnp.float32) + b2_ref[...]
    o_ref[...] = y.astype(o_ref.dtype)


def inductive_node_multi_head(x, y, w1, b1, w2, b2, *, tile_m=512, compute_dtype=None):
    """Pallas forward of GNNInductiveNodeMultiHead. Returns (pred, true).

    x:  [N, D]        node features
    y:  [N, T]        targets (passed through)
    w1: [T, D, H], b1: [T, H]   first layer of each per-task MLP
    w2: [T, H, 1], b2: [T, 1]   second layer of each per-task MLP
    """
    N, D = x.shape
    T, D2, H = w1.shape
    assert D2 == D
    TH = T * H

    # ---- fuse the T per-task MLPs into two dense matmuls (one-time wrapper work) ----
    w1_all = jnp.transpose(w1, (1, 0, 2)).reshape(D, TH)                      # [D, T*H]
    b1_all = b1.reshape(1, TH)                                                # [1, T*H]
    eye_t = jnp.eye(T, dtype=w2.dtype)
    w2_bd = (w2[:, :, 0][:, :, None] * eye_t[:, None, :]).reshape(TH, T)      # block-diag [T*H, T]
    b2_all = b2.reshape(1, T)                                                 # [1, T]

    # ---- lane-pad fused dims to multiples of 128 so loads/stores are unmasked ----
    TH_p = _round_up(TH, LANE)
    T_p = _round_up(T, LANE)
    w1_p = jnp.zeros((D, TH_p), w1_all.dtype).at[:, :TH].set(w1_all)
    b1_p = jnp.zeros((1, TH_p), b1_all.dtype).at[:, :TH].set(b1_all)   # pad bias = 0 -> ReLU(0)=0
    w2_p = jnp.zeros((TH_p, T_p), w2_bd.dtype).at[:TH, :T].set(w2_bd)  # padded rows contribute 0
    b2_p = jnp.zeros((1, T_p), b2_all.dtype).at[:, :T].set(b2_all)

    # ---- row tiling: large tiles, pad N so arbitrary N is supported ----
    tm = max(SUBLANE, min(_round_up(tile_m, SUBLANE), _round_up(N, SUBLANE)))
    M_p = _round_up(N, tm)
    x_p = x if M_p == N else jnp.zeros((M_p, D), x.dtype).at[:N, :].set(x)

    if compute_dtype is not None:
        # e.g. jnp.bfloat16 on v6e/v7x: bf16 MXU operands, f32 accumulation + f32 bias/ReLU.
        x_p = x_p.astype(compute_dtype)
        w1_p = w1_p.astype(compute_dtype)
        w2_p = w2_p.astype(compute_dtype)

    grid = (M_p // tm,)
    pred_p = pl.pallas_call(
        _head_kernel,
        out_shape=jax.ShapeDtypeStruct((M_p, T_p), jnp.float32),
        grid_spec=pltpu.PrefetchScalarGridSpec(
            num_scalar_prefetch=0,
            grid=grid,
            in_specs=[
                pl.BlockSpec((tm, D), lambda i: (i, 0)),        # node tile
                pl.BlockSpec((D, TH_p), lambda i: (0, 0)),      # fused W1 (resident)
                pl.BlockSpec((1, TH_p), lambda i: (0, 0)),      # fused b1 (resident)
                pl.BlockSpec((TH_p, T_p), lambda i: (0, 0)),    # block-diag W2 (resident)
                pl.BlockSpec((1, T_p), lambda i: (0, 0)),       # b2 (resident)
            ],
            out_specs=pl.BlockSpec((tm, T_p), lambda i: (i, 0)),
        ),
        compiler_params=pltpu.CompilerParams(
            dimension_semantics=("parallel",),
            vmem_limit_bytes=64 * 1024 * 1024,
        ),
    )(x_p, w1_p, b1_p, w2_p, b2_p)

    pred = pred_p[:N, :T]  # drop row / lane padding

    # _apply_index with cfg.virtual_node == False: identity on (pred, true).
    # TODO(synk): cfg.virtual_node=True branch (drop last node per graph) needs batch.batch
    # segment indices and a gather; synthetic config disables it.
    return pred, y


def _reference(x, y, w1, b1, w2, b2):
    cols = []
    for t in range(w1.shape[0]):
        h = jnp.maximum(x @ w1[t] + b1[t], 0.0)
        cols.append(h @ w2[t] + b2[t])
    return jnp.concatenate(cols, axis=1), y


if __name__ == "__main__":
    # Small, module-consistent shapes: N nodes, dim_in D, hidden H per task, T tasks.
    N, D, H, T = 22, 32, 16, 4   # N deliberately NOT a multiple of 8 to exercise padding

    key = jax.random.PRNGKey(0)
    kx, ky, kw1, kb1, kw2, kb2 = jax.random.split(key, 6)
    x = jax.random.normal(kx, (N, D), dtype=jnp.float32)
    y_true = jax.random.normal(ky, (N, T), dtype=jnp.float32)        # batch.y (pass-through)
    w1 = 0.1 * jax.random.normal(kw1, (T, D, H), dtype=jnp.float32)
    b1 = 0.1 * jax.random.normal(kb1, (T, H), dtype=jnp.float32)
    w2 = 0.1 * jax.random.normal(kw2, (T, H, 1), dtype=jnp.float32)
    b2 = 0.1 * jax.random.normal(kb2, (T, 1), dtype=jnp.float32)

    pred, true = inductive_node_multi_head(x, y_true, w1, b1, w2, b2)
    pred = jax.block_until_ready(pred)
    true = jax.block_until_ready(true)

    ref_pred, ref_true = _reference(x, y_true, w1, b1, w2, b2)
    assert pred.shape == (N, T) and true.shape == (N, T)
    assert jnp.allclose(pred, ref_pred, atol=1e-5, rtol=1e-5)
    assert jnp.allclose(true, ref_true)

    print("KERNEL_OK")
</pallas_src>

<mosaic_0001>
module attributes {stable_mosaic.version = 11 : i64} {
  func.func @_head_kernel(%arg0: i32, %arg1: memref<24x32xf32, #tpu.memory_space<vmem>>, %arg2: memref<32x128xf32, #tpu.memory_space<vmem>>, %arg3: memref<1x128xf32, #tpu.memory_space<vmem>>, %arg4: memref<128x128xf32, #tpu.memory_space<vmem>>, %arg5: memref<1x128xf32, #tpu.memory_space<vmem>>, %arg6: memref<24x128xf32, #tpu.memory_space<vmem>>) attributes {dimension_semantics = [#tpu.dimension_semantics<parallel>], iteration_bounds = array<i64: 1>, scalar_prefetch = 0 : i64, scratch_operands = 0 : i64, tpu.core_type = #tpu.core_type<tc>, window_params = [{transform_indices = @transform_0, window_bounds = array<i64: 24, 32>}, {pipeline_mode = #tpu.pipeline_mode<synchronous>, transform_indices = @transform_1, window_bounds = array<i64: 32, 128>}, {pipeline_mode = #tpu.pipeline_mode<synchronous>, transform_indices = @transform_2, window_bounds = array<i64: 1, 128>}, {pipeline_mode = #tpu.pipeline_mode<synchronous>, transform_indices = @transform_3, window_bounds = array<i64: 128, 128>}, {pipeline_mode = #tpu.pipeline_mode<synchronous>, transform_indices = @transform_4, window_bounds = array<i64: 1, 128>}, {transform_indices = @transform_5, window_bounds = array<i64: 24, 128>}]} {
    %c0 = arith.constant 0 : index
    %c0_0 = arith.constant 0 : index
    %0 = vector.load %arg1[%c0, %c0_0] : memref<24x32xf32, #tpu.memory_space<vmem>>, vector<24x32xf32>
    %c0_1 = arith.constant 0 : index
    %c0_2 = arith.constant 0 : index
    %1 = vector.load %arg2[%c0_1, %c0_2] : memref<32x128xf32, #tpu.memory_space<vmem>>, vector<32x128xf32>
    %cst = arith.constant dense<0.000000e+00> : vector<24x128xf32>
    %2 = tpu.matmul %0, %1, %cst {dimension_numbers = #tpu.dot_dimension_numbers<[1], [0], [0], [1], [0, 0, 1, 1], [], []>} : vector<24x32xf32>, vector<32x128xf32>, vector<24x128xf32> -> vector<24x128xf32>
    %c0_3 = arith.constant 0 : index
    %c0_4 = arith.constant 0 : index
    %3 = vector.load %arg3[%c0_3, %c0_4] : memref<1x128xf32, #tpu.memory_space<vmem>>, vector<1x128xf32>
    %4 = vector.broadcast %3 : vector<1x128xf32> to vector<24x128xf32>
    %5 = arith.addf %2, %4 : vector<24x128xf32>
    %cst_5 = arith.constant 0.000000e+00 : f32
    %6 = vector.broadcast %cst_5 : f32 to vector<24x128xf32>
    %7 = arith.maximumf %5, %6 : vector<24x128xf32>
    %c0_6 = arith.constant 0 : index
    %c0_7 = arith.constant 0 : index
    %8 = vector.load %arg4[%c0_6, %c0_7] : memref<128x128xf32, #tpu.memory_space<vmem>>, vector<128x128xf32>
    %cst_8 = arith.constant dense<0.000000e+00> : vector<24x128xf32>
    %9 = tpu.matmul %7, %8, %cst_8 {dimension_numbers = #tpu.dot_dimension_numbers<[1], [0], [0], [1], [0, 0, 1, 1], [], []>} : vector<24x128xf32>, vector<128x128xf32>, vector<24x128xf32> -> vector<24x128xf32>
    %c0_9 = arith.constant 0 : index
    %c0_10 = arith.constant 0 : index
    %10 = vector.load %arg5[%c0_9, %c0_10] : memref<1x128xf32, #tpu.memory_space<vmem>>, vector<1x128xf32>
    %11 = vector.broadcast %10 : vector<1x128xf32> to vector<24x128xf32>
    %12 = arith.addf %9, %11 : vector<24x128xf32>
    %c0_11 = arith.constant 0 : index
    %c0_12 = arith.constant 0 : index
    %13 = vector.load %arg6[%c0_11, %c0_12] : memref<24x128xf32, #tpu.memory_space<vmem>>, vector<24x128xf32>
    tpu.vector_store %arg6[%c0_11, %c0_12], %12 {strides = array<i32>} : memref<24x128xf32, #tpu.memory_space<vmem>>, vector<24x128xf32>,
    return
  }
  func.func @transform_0(%arg0: i32) -> (i32, i32) {
    %c0_i32 = arith.constant 0 : i32
    %c0_i32_0 = arith.constant 0 : i32
    return %arg0, %c0_i32 : i32, i32
  }
  func.func @transform_1(%arg0: i32) -> (i32, i32) {
    %c0_i32 = arith.constant 0 : i32
    %c0_i32_0 = arith.constant 0 : i32
    %c0_i32_1 = arith.constant 0 : i32
    return %c0_i32, %c0_i32_0 : i32, i32
  }
  func.func @transform_2(%arg0: i32) -> (i32, i32) {
    %c0_i32 = arith.constant 0 : i32
    %c0_i32_0 = arith.constant 0 : i32
    %c0_i32_1 = arith.constant 0 : i32
    return %c0_i32, %c0_i32_0 : i32, i32
  }
  func.func @transform_3(%arg0: i32) -> (i32, i32) {
    %c0_i32 = arith.constant 0 : i32
    %c0_i32_0 = arith.constant 0 : i32
    %c0_i32_1 = arith.constant 0 : i32
    return %c0_i32, %c0_i32_0 : i32, i32
  }
  func.func @transform_4(%arg0: i32) -> (i32, i32) {
    %c0_i32 = arith.constant 0 : i32
    %c0_i32_0 = arith.constant 0 : i32
    %c0_i32_1 = arith.constant 0 : i32
    return %c0_i32, %c0_i32_0 : i32, i32
  }
  func.func @transform_5(%arg0: i32) -> (i32, i32) {
    %c0_i32 = arith.constant 0 : i32
    %c0_i32_0 = arith.constant 0 : i32
    return %arg0, %c0_i32 : i32, i32
  }
}

</mosaic_0001>

<llo_original>
// kernel: tpu_custom_call.1
$region0: #{tpu_custom_call.1}
  #allocation0 [shape = 'u32[]', space=smem, size = 0x4, offset = 0x4, fixed_abs, tag = 'smem constant byte address 0x4 - core index']
  #allocation1 [shape = 'u32[144,128]{1,0:T(1,128)}', space=vmem, size = 0x12000, scoped, tag = 'internal scratch']
  %s0 = inlined_call_operand.hbm [shape: f32[24,32], index: 0, kind: input, shape index: {}]
  %s1 = inlined_call_operand.hbm [shape: f32[32,128], index: 1, kind: input, shape index: {}]
  %s2 = inlined_call_operand.hbm [shape: f32[1,128], index: 2, kind: input, shape index: {}]
  %s3 = inlined_call_operand.hbm [shape: f32[128,128], index: 3, kind: input, shape index: {}]
  %s4 = inlined_call_operand.hbm [shape: f32[1,128], index: 4, kind: input, shape index: {}]
  %s5 = inlined_call_operand.hbm [shape: f32[24,128], index: 5, kind: output, shape index: {}]
  %s6 = sld [smem:[#allocation0]]
  $region50: #{tpu_custom_call.1} parent=0
    _
  %s8 = ssub.s32 1, %s6
  %s9 = scalar_select 0, %s8, %s6
  $region1: #{tpu_custom_call.1} parent=0
    #allocation2 [shape = 'u8[12288]{0}', space=vmem, size = 0x3000, scoped, tag = 'input window, operand 0, single buffered']
    #allocation3 [shape = 's32[1]{0}', space=sflag, size = 0x4, scoped, tag = 'scoped memory for tpu_custom_call.1']
    #allocation4 [shape = 's32[1]{0}', space=sflag, size = 0x4, scoped, tag = 'scoped memory for tpu_custom_call.1']
    #allocation5 [shape = 'u8[16384]{0}', space=vmem, size = 0x4000, scoped, tag = 'input window, operand 1, single buffered']
    #allocation6 [shape = 's32[1]{0}', space=sflag, size = 0x4, scoped, tag = 'scoped memory for tpu_custom_call.1']
    #allocation7 [shape = 'u8[512]{0}', space=vmem, size = 0x400, scoped, tag = 'input window, operand 2, single buffered']
    #allocation8 [shape = 'u8[65536]{0}', space=vmem, size = 0x10000, scoped, tag = 'input window, operand 3, single buffered']
    #allocation9 [shape = 's32[1]{0}', space=sflag, size = 0x4, scoped, tag = 'scoped memory for tpu_custom_call.1']
    #allocation10 [shape = 'u8[512]{0}', space=vmem, size = 0x400, scoped, tag = 'input window, operand 4, single buffered']
    #allocation11 [shape = 'u8[12288]{0}', space=vmem, size = 0x3000, scoped, tag = 'output window, operand 0, single buffered']
    %10 = vsyncpa [#allocation3], 0
    %11 = vsyncpa [#allocation6], 0
    %12 = vsyncpa [#allocation9], 0
    %13 = vsyncpa [#allocation4], 0
    // Predicated region
    $region2: #{tpu_custom_call.1} parent=1 // pred_check
      _
    $region3: #{tpu_custom_call.1} parent=1 // pred_check_branch
      %15 = sbr.rel (0) target = $region5
    $region4: #{tpu_custom_call.1} parent=1 // pred_region
      %s17 = ssub.s32 384, 384
      %18 = vsyncadd [#allocation3], %s17
      %s19 = sshll.u32 [#allocation2], 4
      %s20 = int_to_ptr.vmem [resolvable:$true] %s19
      %25 = dma.hbm_to_vmem [thread:$0]  %s0, 384, %s20, [#allocation3], 128, 128, 8
    $region5: #{tpu_custom_call.1} parent=1 // pred_fallthru
      _
    // Predicated region
    $region6: #{tpu_custom_call.1} parent=1 // pred_check
      _
    $region7: #{tpu_custom_call.1} parent=1 // pred_check_branch
      %27 = sbr.rel (0) target = $region9
    $region8: #{tpu_custom_call.1} parent=1 // pred_region
      %s29 = ssub.s32 512, 512
      %30 = vsyncadd [#allocation6], %s29
      %s31 = sshll.u32 [#allocation5], 4
      %s32 = int_to_ptr.vmem [resolvable:$true] %s31
      %37 = dma.hbm_to_vmem [thread:$0]  %s1, 512, %s32, [#allocation6], 128, 128, 8
    $region9: #{tpu_custom_call.1} parent=1 // pred_fallthru
      _
    // Predicated region
    $region10: #{tpu_custom_call.1} parent=1 // pred_check
      _
    $region11: #{tpu_custom_call.1} parent=1 // pred_check_branch
      %39 = sbr.rel (0) target = $region13
    $region12: #{tpu_custom_call.1} parent=1 // pred_region
      %s41 = ssub.s32 16, 16
      %42 = vsyncadd [#allocation6], %s41
      %s44 = sshll.u32 [#allocation7], 4
      %s45 = int_to_ptr.vmem [resolvable:$true] %s44
      %47 = dma.hbm_to_vmem [thread:$0]  %s2, 16, %s45, [#allocation6]
    $region13: #{tpu_custom_call.1} parent=1 // pred_fallthru
      _
    // Predicated region
    $region14: #{tpu_custom_call.1} parent=1 // pred_check
      _
    $region15: #{tpu_custom_call.1} parent=1 // pred_check_branch
      %49 = sbr.rel (0) target = $region17
    $region16: #{tpu_custom_call.1} parent=1 // pred_region
      %s51 = ssub.s32 2048, 2048
      %52 = vsyncadd [#allocation9], %s51
      %s53 = sshll.u32 [#allocation8], 4
      %s54 = int_to_ptr.vmem [resolvable:$true] %s53
      %59 = dma.hbm_to_vmem [thread:$0]  %s3, 2048, %s54, [#allocation9], 128, 128, 8
    $region17: #{tpu_custom_call.1} parent=1 // pred_fallthru
      _
    // Predicated region
    $region18: #{tpu_custom_call.1} parent=1 // pred_check
      _
    $region19: #{tpu_custom_call.1} parent=1 // pred_check_branch
      %61 = sbr.rel (0) target = $region21
    $region20: #{tpu_custom_call.1} parent=1 // pred_region
      %s63 = ssub.s32 16, 16
      %64 = vsyncadd [#allocation9], %s63
      %s66 = sshll.u32 [#allocation10], 4
      %s67 = int_to_ptr.vmem [resolvable:$true] %s66
      %69 = dma.hbm_to_vmem [thread:$0]  %s4, 16, %s67, [#allocation9]
    $region21: #{tpu_custom_call.1} parent=1 // pred_fallthru
      _
    // Predicated region
    $region22: #{tpu_custom_call.1} parent=1 // pred_check
      _
    $region23: #{tpu_custom_call.1} parent=1 // pred_check_branch
      %71 = sbr.rel (0) target = $region25
    $region24: #{tpu_custom_call.1} parent=1 // pred_region
      %72 = dma.done [#allocation3], 384
    $region25: #{tpu_custom_call.1} parent=1 // pred_fallthru
      _
    // Predicated region
    $region26: #{tpu_custom_call.1} parent=1 // pred_check
      _
    $region27: #{tpu_custom_call.1} parent=1 // pred_check_branch
      %74 = sbr.rel (0) target = $region29
    $region28: #{tpu_custom_call.1} parent=1 // pred_region
      %75 = dma.done [#allocation6], 512
    $region29: #{tpu_custom_call.1} parent=1 // pred_fallthru
      _
    // Predicated region
    $region30: #{tpu_custom_call.1} parent=1 // pred_check
      _
    $region31: #{tpu_custom_call.1} parent=1 // pred_check_branch
      %77 = sbr.rel (0) target = $region33
    $region32: #{tpu_custom_call.1} parent=1 // pred_region
      %78 = dma.done [#allocation6], 16
    $region33: #{tpu_custom_call.1} parent=1 // pred_fallthru
      _
    // Predicated region
    $region34: #{tpu_custom_call.1} parent=1 // pred_check
      _
    $region35: #{tpu_custom_call.1} parent=1 // pred_check_branch
      %80 = sbr.rel (0) target = $region37
    $region36: #{tpu_custom_call.1} parent=1 // pred_region
      %81 = dma.done [#allocation9], 2048
    $region37: #{tpu_custom_call.1} parent=1 // pred_fallthru
      _
    // Predicated region
    $region38: #{tpu_custom_call.1} parent=1 // pred_check
      _
    $region39: #{tpu_custom_call.1} parent=1 // pred_check_branch
      %83 = sbr.rel (0) target = $region41
    $region40: #{tpu_custom_call.1} parent=1 // pred_region
      %84 = dma.done [#allocation9], 16
    $region41: #{tpu_custom_call.1} parent=1 // pred_fallthru
      _
    %v85 = vld [vmem:[#allocation2] sm:$0xff]
    %v86 = vld [vmem:[#allocation2 + $0x8] sm:$0xff]
    %v87 = vld [vmem:[#allocation2 + $0x10] sm:$0xff]
    %v88 = vld [vmem:[#allocation5] sm:$0xff]
    %v89 = vld [vmem:[#allocation5 + $0x8] sm:$0xff]
    %v90 = vld [vmem:[#allocation5 + $0x10] sm:$0xff]
    %v91 = vld [vmem:[#allocation5 + $0x18] sm:$0xff]
    %v92 = vld [vmem:[#allocation7] sm:$0x1]
    %v94 = vlaneseq
    %v95 = vshrl.u32 %v94, 7
    %v96 = vsub.s32 0, %v95
    %v97 = vrot.slane %v92, %v96
    %vm99 = vcmask 261120
    %v101 = vsel %vm99, %v85, 0
    %v104 = vsel %vm99, %v86, 0
    %v107 = vsel %vm99, %v87, 0
    %109 = vmatprep.subr.mxu0 0.0
    %110 = vmatpush1.msra.mxu0 %v88
    %111 = vmatprep.subr.mxu0 0.0
    %112 = vmatpush1.msra.mxu0 %v89
    %113 = vmatprep.subr.mxu0 0.0
    %114 = vmatpush1.msra.mxu0 %v90
    %115 = vmatprep.subr.mxu0 0.0
    %116 = vmatpush1.msra.mxu0 %v91
    %117 = vmatprep.subr.mxu0 0.0
    %118 = vmatpush1.msra.mxu0 0.0
    %119 = vmatprep.subr.mxu0 0.0
    %120 = vmatpush1.msra.mxu0 0.0
    %121 = vmatprep.subr.mxu0 0.0
    %122 = vmatpush1.msra.mxu0 0.0
    %123 = vmatprep.subr.mxu0 0.0
    %124 = vmatpush1.msra.mxu0 0.0
    %125 = vmatprep.subr.mxu0 0.0
    %126 = vmatpush1.msra.mxu0 0.0
    %127 = vmatprep.subr.mxu0 0.0
    %128 = vmatpush1.msra.mxu0 0.0
    %129 = vmatprep.subr.mxu0 0.0
    %130 = vmatpush1.msra.mxu0 0.0
    %131 = vmatprep.subr.mxu0 0.0
    %132 = vmatpush1.msra.mxu0 0.0
    %133 = vmatprep.subr.mxu0 0.0
    %134 = vmatpush1.msra.mxu0 0.0
    %135 = vmatprep.subr.mxu0 0.0
    %136 = vmatpush1.msra.mxu0 0.0
    %137 = vmatprep.subr.mxu0 0.0
    %138 = vmatpush1.msra.mxu0 0.0
    %139 = vmatprep.subr.mxu0 0.0
    %140 = vmatpush1.msra.mxu0 0.0
    %141 = vmatprep.subr.mxu0 0.0
    %142 = vmatpush1.msra.mxu0 0.0
    %143 = vmatprep.subr.mxu0 0.0
    %144 = vmatpush1.msra.mxu0 0.0
    %145 = vmatprep.subr.mxu0 0.0
    %146 = vmatpush1.msra.mxu0 0.0
    %147 = vmatprep.subr.mxu0 0.0
    %148 = vmatpush1.msra.mxu0 0.0
    %149 = vmatprep.subr.mxu0 0.0
    %150 = vmatpush1.msra.mxu0 0.0
    %151 = vmatprep.subr.mxu0 0.0
    %152 = vmatpush1.msra.mxu0 0.0
    %153 = vmatprep.subr.mxu0 0.0
    %154 = vmatpush1.msra.mxu0 0.0
    %155 = vmatprep.subr.mxu0 0.0
    %156 = vmatpush1.msra.mxu0 0.0
    %157 = vmatprep.subr.mxu0 0.0
    %158 = vmatpush1.msra.mxu0 0.0
    %159 = vmatprep.subr.mxu0 0.0
    %160 = vmatpush1.msra.mxu0 0.0
    %161 = vmatprep.subr.mxu0 0.0
    %162 = vmatpush1.msra.mxu0 0.0
    %163 = vmatprep.subr.mxu0 0.0
    %164 = vmatpush1.msra.mxu0 0.0
    %165 = vmatprep.subr.mxu0 0.0
    %166 = vmatpush1.msra.mxu0 0.0
    %167 = vmatprep.subr.mxu0 0.0
    %168 = vmatpush1.msra.mxu0 0.0
    %169 = vmatprep.subr.mxu0 0.0
    %170 = vmatpush1.msra.mxu0 0.0
    %171 = vmatprep.subr.mxu0 0.0
    %172 = vmatpush1.msra.mxu0 0.0
    %173 = vmatprep.mubr.f32.mxu0 0.0
    %174 = vmatmul.mubr.f32.gmra.mrb[0].mxu0 %v101
    %v175 = vpop.f32.mrb[0].mxu0
    %v176 = vadd.f32 %v97, %v175
    %v177 = vpop.f32.mrb[0].mxu0
    %178 = vmatprep.mubr.f32.mxu0 0.0
    %179 = vmatmul.mubr.f32.gmra.mrb[0].mxu0 %v104
    %v180 = vpop.f32.mrb[0].mxu0
    %v181 = vadd.f32 %v97, %v180
    %v182 = vpop.f32.mrb[0].mxu0
    %183 = vmatprep.mubr.f32.mxu0 0.0
    %184 = vmatmul.mubr.f32.gmra.mrb[0].mxu0 %v107
    %v185 = vpop.f32.mrb[0].mxu0
    %v186 = vadd.f32 %v97, %v185
    %v187 = vpop.f32.mrb[0].mxu0
    %188 = vdwg.mxu0
    %v189 = vmax.f32 %v176, 0.0
    %v190 = vmax.f32 %v181, 0.0
    %v191 = vmax.f32 %v186, 0.0
    %v192 = vld [vmem:[#allocation8] sm:$0xff]
    %v193 = vld [vmem:[#allocation8 + $0x8] sm:$0xff]
    %v194 = vld [vmem:[#allocation8 + $0x10] sm:$0xff]
    %v195 = vld [vmem:[#allocation8 + $0x18] sm:$0xff]
    %v196 = vld [vmem:[#allocation8 + $0x20] sm:$0xff]
    %v197 = vld [vmem:[#allocation8 + $0x28] sm:$0xff]
    %v198 = vld [vmem:[#allocation8 + $0x30] sm:$0xff]
    %v199 = vld [vmem:[#allocation8 + $0x38] sm:$0xff]
    %v200 = vld [vmem:[#allocation8 + $0x40] sm:$0xff]
    %v201 = vld [vmem:[#allocation8 + $0x48] sm:$0xff]
    %v202 = vld [vmem:[#allocation8 + $0x50] sm:$0xff]
    %v203 = vld [vmem:[#allocation8 + $0x58] sm:$0xff]
    %v204 = vld [vmem:[#allocation8 + $0x60] sm:$0xff]
    %v205 = vld [vmem:[#allocation8 + $0x68] sm:$0xff]
    %v206 = vld [vmem:[#allocation8 + $0x70] sm:$0xff]
    %v207 = vld [vmem:[#allocation8 + $0x78] sm:$0xff]
    %v208 = vld [vmem:[#allocation10] sm:$0x1]
    %v210 = vlaneseq
    %v211 = vshrl.u32 %v210, 7
    %v212 = vsub.s32 0, %v211
    %v213 = vrot.slane %v208, %v212
    %215 = vmatprep.subr.mxu0 0.0
    %216 = vmatpush1.msra.mxu0 %v192
    %217 = vmatprep.subr.mxu0 0.0
    %218 = vmatpush1.msra.mxu0 %v193
    %219 = vmatprep.subr.mxu0 0.0
    %220 = vmatpush1.msra.mxu0 %v194
    %221 = vmatprep.subr.mxu0 0.0
    %222 = vmatpush1.msra.mxu0 %v195
    %223 = vmatprep.subr.mxu0 0.0
    %224 = vmatpush1.msra.mxu0 %v196
    %225 = vmatprep.subr.mxu0 0.0
    %226 = vmatpush1.msra.mxu0 %v197
    %227 = vmatprep.subr.mxu0 0.0
    %228 = vmatpush1.msra.mxu0 %v198
    %229 = vmatprep.subr.mxu0 0.0
    %230 = vmatpush1.msra.mxu0 %v199
    %231 = vmatprep.subr.mxu0 0.0
    %232 = vmatpush1.msra.mxu0 %v200
    %233 = vmatprep.subr.mxu0 0.0
    %234 = vmatpush1.msra.mxu0 %v201
    %235 = vmatprep.subr.mxu0 0.0
    %236 = vmatpush1.msra.mxu0 %v202
    %237 = vmatprep.subr.mxu0 0.0
    %238 = vmatpush1.msra.mxu0 %v203
    %239 = vmatprep.subr.mxu0 0.0
    %240 = vmatpush1.msra.mxu0 %v204
    %241 = vmatprep.subr.mxu0 0.0
    %242 = vmatpush1.msra.mxu0 %v205
    %243 = vmatprep.subr.mxu0 0.0
    %244 = vmatpush1.msra.mxu0 %v206
    %245 = vmatprep.subr.mxu0 0.0
    %246 = vmatpush1.msra.mxu0 %v207
    %247 = vmatprep.subr.mxu0 0.0
    %248 = vmatpush1.msra.mxu0 0.0
    %249 = vmatprep.subr.mxu0 0.0
    %250 = vmatpush1.msra.mxu0 0.0
    %251 = vmatprep.subr.mxu0 0.0
    %252 = vmatpush1.msra.mxu0 0.0
    %253 = vmatprep.subr.mxu0 0.0
    %254 = vmatpush1.msra.mxu0 0.0
    %255 = vmatprep.subr.mxu0 0.0
    %256 = vmatpush1.msra.mxu0 0.0
    %257 = vmatprep.subr.mxu0 0.0
    %258 = vmatpush1.msra.mxu0 0.0
    %259 = vmatprep.subr.mxu0 0.0
    %260 = vmatpush1.msra.mxu0 0.0
    %261 = vmatprep.subr.mxu0 0.0
    %262 = vmatpush1.msra.mxu0 0.0
    %263 = vmatprep.subr.mxu0 0.0
    %264 = vmatpush1.msra.mxu0 0.0
    %265 = vmatprep.subr.mxu0 0.0
    %266 = vmatpush1.msra.mxu0 0.0
    %267 = vmatprep.subr.mxu0 0.0
    %268 = vmatpush1.msra.mxu0 0.0
    %269 = vmatprep.subr.mxu0 0.0
    %270 = vmatpush1.msra.mxu0 0.0
    %271 = vmatprep.subr.mxu0 0.0
    %272 = vmatpush1.msra.mxu0 0.0
    %273 = vmatprep.subr.mxu0 0.0
    %274 = vmatpush1.msra.mxu0 0.0
    %275 = vmatprep.subr.mxu0 0.0
    %276 = vmatpush1.msra.mxu0 0.0
    %277 = vmatprep.subr.mxu0 0.0
    %278 = vmatpush1.msra.mxu0 0.0
    %279 = vmatprep.mubr.f32.mxu0 0.0
    %280 = vmatmul.mubr.f32.gmra.mrb[0].mxu0 %v189
    %v281 = vpop.f32.mrb[0].mxu0
    %v282 = vadd.f32 %v213, %v281
    %v283 = vpop.f32.mrb[0].mxu0
    %284 = vmatprep.mubr.f32.mxu0 0.0
    %285 = vmatmul.mubr.f32.gmra.mrb[0].mxu0 %v190
    %v286 = vpop.f32.mrb[0].mxu0
    %v287 = vadd.f32 %v213, %v286
    %v288 = vpop.f32.mrb[0].mxu0
    %289 = vmatprep.mubr.f32.mxu0 0.0
    %290 = vmatmul.mubr.f32.gmra.mrb[0].mxu0 %v191
    %v291 = vpop.f32.mrb[0].mxu0
    %v292 = vadd.f32 %v213, %v291
    %v293 = vpop.f32.mrb[0].mxu0
    %294 = vdwg.mxu0
    %295 = vst [vmem:[#allocation11] sm:$0xff] %v282
    %296 = vst [vmem:[#allocation11 + $0x8] sm:$0xff] %v287
    %297 = vst [vmem:[#allocation11 + $0x10] sm:$0xff] %v292
    // Predicated region
    $region42: #{tpu_custom_call.1} parent=1 // pred_check
      _
    $region43: #{tpu_custom_call.1} parent=1 // pred_check_branch
      %299 = sbr.rel (0) target = $region45
    $region44: #{tpu_custom_call.1} parent=1 // pred_region
      %s301 = ssub.s32 384, 384
      %302 = vsyncadd [#allocation4], %s301
      %s303 = sshll.u32 [#allocation11], 4
      %s304 = int_to_ptr.vmem [resolvable:$true] %s303
      %309 = dma.vmem_to_hbm [thread:$0]  %s304, 384, %s5, [#allocation4], 128, 128, 8
    $region45: #{tpu_custom_call.1} parent=1 // pred_fallthru
      _
    // Predicated region
    $region46: #{tpu_custom_call.1} parent=1 // pred_check
      _
    $region47: #{tpu_custom_call.1} parent=1 // pred_check_branch
      %311 = sbr.rel (0) target = $region49
    $region48: #{tpu_custom_call.1} parent=1 // pred_region
      %312 = dma.done [#allocation4], 384
    $region49: #{tpu_custom_call.1} parent=1 // pred_fallthru
      _
    %313 = vsyncpa [#allocation3], 1
    %314 = vsyncpa [#allocation6], 1
    %315 = vsyncpa [#allocation9], 1
    %316 = vsyncpa [#allocation4], 1

</llo_original>
